<compile_context>
chip_gen: v7x
topology: tpu7x:2x2x1
jax: 0.10.0
libtpu: 0.0.40
codegen_flags: <defaults>
</compile_context>

<pallas_src>
import functools

import jax
import jax.numpy as jnp
from jax.experimental import pallas as pl
from jax.experimental.pallas import tpu as pltpu


def _round_up(x, m):
    return -(-x // m) * m


def _nll_sum_kernel(pred_ref, tgt_ref, out_ref, acc_ref, *, num_slots, chunk_rows):
    """Sum of picked log-probs over one (tile_rows, L) block.

    grid = (partition "parallel", row-tile "arbitrary").  acc_ref is a small
    (chunk_rows, L) f32 running accumulator for the current partition; rows whose
    target lane is -1 (padding / ignore_index / garbage OOB rows) never match the
    lane iota, so they contribute nothing.
    """
    i = pl.program_id(1)

    @pl.when(i == 0)
    def _init():
        acc_ref[...] = jnp.zeros_like(acc_ref)

    tile_rows, lanes = pred_ref.shape
    n_chunks = tile_rows // chunk_rows
    lane = jax.lax.broadcasted_iota(jnp.int32, (chunk_rows, lanes), 1)  # hoisted once

    @pl.loop(0, n_chunks)
    def _(j):
        r0 = pl.multiple_of(j * chunk_rows, chunk_rows)
        logp = pred_ref[pl.ds(r0, chunk_rows), :].astype(jnp.float32)
        tgt = tgt_ref[pl.ds(r0, chunk_rows), :]
        mask = lane == tgt[:, 0:1]
        for g in range(1, num_slots):               # static unroll, num_slots <= 8
            mask = jnp.logical_or(mask, lane == tgt[:, g:g + 1])
        acc_ref[...] += jnp.where(mask, logp, 0.0)  # pure VPU adds, no per-step reduction

    @pl.when(i == pl.num_programs(1) - 1)
    def _finalize():
        # single cross-lane / cross-sublane reduction per partition
        out_ref[...] = jnp.sum(acc_ref[...], keepdims=True)


def get_loss_pallas(pred, target, trans_feat=None, *,
                    pred_block_bytes=8 * 1024 * 1024,
                    chunk_rows=512,
                    num_partitions=2):
    """Equivalent of get_loss().forward(pred, target, trans_feat) = F.nll_loss(pred, target)."""
    del trans_feat                                   # unused, as in the PyTorch forward
    pred = jnp.asarray(pred)
    if pred.dtype not in (jnp.dtype(jnp.float32), jnp.dtype(jnp.bfloat16)):
        pred = pred.astype(jnp.float32)
    target = jnp.asarray(target, jnp.int32).reshape(-1)
    B, C = pred.shape

    valid = (target >= 0) & (target < C)
    cnt = jnp.sum(valid).astype(jnp.float32)         # exact int count, f32 divide in epilogue

    # Lane-dense packing only when it is a free metadata reshape and the compare unroll is small.
    G = 1
    if 0 < C <= 128 and 128 % C == 0:
        g = 128 // C
        if g <= 8 and B % g == 0:
            G = g
    if G > 1:
        L = 128
        n_rows = B // G
        pred_view = jnp.reshape(pred, (n_rows, L))   # free: contiguous row-major reshape
        slot = jnp.arange(B, dtype=jnp.int32) % G
        tgt_lane = jnp.where(valid, slot * C + target, -1).reshape(n_rows, G)
    else:
        # Un-packed fallback: stream pred exactly as laid out in HBM, zero pre-pass.
        L = C
        n_rows = B
        pred_view = pred
        tgt_lane = jnp.where(valid, target, -1).reshape(n_rows, 1)

    if n_rows < 8:                                   # tiny batches: keep one full sublane tile
        pred_view = jnp.pad(pred_view, ((0, 8 - n_rows), (0, 0)))

    # ---- tile sizing: budget BOTH double-buffered pred tiles and the lane-padded int32
    # target tiles ((tile_rows, G) i32 occupies 512 B/row in VMEM).
    lanes_pad = _round_up(L, 128)
    pred_row_bytes = lanes_pad * pred_view.dtype.itemsize
    tgt_row_bytes = 128 * 4
    cr = max(8, min(_round_up(chunk_rows, 8), _round_up(n_rows, 8)))
    tile_rows = max(cr, (pred_block_bytes // pred_row_bytes) // cr * cr)
    vmem_cap = 36 * 1024 * 1024                      # pipeline cap safe on v5e/v6e/v7x
    tile_rows = min(tile_rows,
                    max(cr, (vmem_cap // (2 * (pred_row_bytes + tgt_row_bytes))) // cr * cr))
    tile_rows = min(tile_rows, _round_up(n_rows, cr))

    n_tiles = -(-n_rows // tile_rows)
    P = max(1, min(num_partitions, n_tiles))         # 2-TC split on v7x, harmless elsewhere
    tpp = -(-n_tiles // P)
    rows_padded = P * tpp * tile_rows
    last_tile = n_tiles - 1

    # Only the tiny target array is padded (-1 == never matches); pred gets no extra HBM pass.
    tgt_padded = jnp.pad(tgt_lane, ((0, rows_padded - n_rows), (0, 0)), constant_values=-1)

    pipeline_bytes = 2 * tile_rows * (pred_row_bytes + tgt_row_bytes)
    vmem_limit = int(min(max(32 << 20, pipeline_bytes + (8 << 20)), 48 << 20))

    def pred_index_map(p, i):
        # Grid tiles past the real data re-read the last valid tile; their targets are all -1,
        # so (like the garbage rows of a partially OOB tile) they contribute nothing.
        return (jnp.minimum(p * tpp + i, last_tile), 0)

    def tgt_index_map(p, i):
        return (p * tpp + i, 0)

    kernel = functools.partial(_nll_sum_kernel, num_slots=G, chunk_rows=cr)

    partial_sums = pl.pallas_call(
        kernel,
        out_shape=jax.ShapeDtypeStruct((P, 1), jnp.float32),
        grid=(P, tpp),
        in_specs=[
            pl.BlockSpec((tile_rows, L), pred_index_map),
            pl.BlockSpec((tile_rows, G), tgt_index_map),
        ],
        out_specs=pl.BlockSpec((1, 1), lambda p, i: (p, 0)),
        scratch_shapes=[pltpu.VMEM((cr, L), jnp.float32)],
        compiler_params=pltpu.CompilerParams(
            dimension_semantics=("parallel", "arbitrary"),
            vmem_limit_bytes=vmem_limit,
        ),
    )(pred_view, tgt_padded)

    # negate + mean over valid targets (NaN via 0/0 if every target is ignored, like PyTorch)
    return -jnp.sum(partial_sums) / cnt


if __name__ == "__main__":
    key = jax.random.PRNGKey(0)
    k1, k2, k3, k4, k5 = jax.random.split(key, 5)

    # Case 1: PointNet-style head, batch=8, classes=32 (lane-dense packed path, G=4).
    B, C = 8, 32
    pred = jax.nn.log_softmax(jax.random.normal(k1, (B, C), jnp.float32), axis=-1)
    target = jax.random.randint(k2, (B,), 0, C, dtype=jnp.int32)
    trans_feat = jax.random.normal(k3, (B, 3, 3), jnp.float32)    # unused by the loss
    loss = jax.block_until_ready(get_loss_pallas(pred, target, trans_feat))
    ref = -jnp.mean(pred[jnp.arange(B), target])
    assert jnp.allclose(loss, ref, rtol=1e-5, atol=1e-5), (loss, ref)

    # Case 2: un-packed path (C=40 does not divide 128), multi-tile streaming grid with a
    # 2-way partition split, a ragged tail, an ignore_index=-100 target and one fully
    # out-of-range grid tile (clamped pred index, masked by -1 targets).
    B2, C2 = 998, 40
    pred2 = jax.nn.log_softmax(jax.random.normal(k4, (B2, C2), jnp.float32), axis=-1)
    target2 = jax.random.randint(k2, (B2,), 0, C2, dtype=jnp.int32)
    target2 = target2.at[5].set(-100)
    loss2 = jax.block_until_ready(
        get_loss_pallas(pred2, target2, None,
                        pred_block_bytes=448 * 512, chunk_rows=64, num_partitions=2))
    valid2 = (target2 >= 0) & (target2 < C2)
    picked2 = jnp.where(valid2, pred2[jnp.arange(B2), jnp.clip(target2, 0, C2 - 1)], 0.0)
    ref2 = -jnp.sum(picked2) / jnp.sum(valid2)
    assert jnp.allclose(loss2, ref2, rtol=1e-5, atol=1e-5), (loss2, ref2)

    # Case 3: bfloat16 log-probs streamed as bf16 and upcast inside the kernel.
    B3, C3 = 256, 32
    pred3 = jax.nn.log_softmax(
        jax.random.normal(k5, (B3, C3), jnp.float32), axis=-1).astype(jnp.bfloat16)
    target3 = jax.random.randint(k2, (B3,), 0, C3, dtype=jnp.int32)
    loss3 = jax.block_until_ready(get_loss_pallas(pred3, target3, None))
    ref3 = -jnp.mean(pred3.astype(jnp.float32)[jnp.arange(B3), target3])
    assert jnp.allclose(loss3, ref3, rtol=1e-4, atol=1e-4), (loss3, ref3)

    print("KERNEL_OK")
</pallas_src>

<mosaic_0001>
module attributes {stable_mosaic.version = 11 : i64} {
  func.func @_nll_sum_kernel(%arg0: i32, %arg1: i32, %arg2: memref<8x128xf32, #tpu.memory_space<vmem>>, %arg3: memref<8x4xi32, #tpu.memory_space<vmem>>, %arg4: memref<1x1xf32, #tpu.memory_space<vmem>>, %arg5: memref<8x128xf32, #tpu.memory_space<vmem>>) attributes {dimension_semantics = [#tpu.dimension_semantics<parallel>, #tpu.dimension_semantics<arbitrary>], iteration_bounds = array<i64: 1, 1>, scalar_prefetch = 0 : i64, scratch_operands = 1 : i64, tpu.core_type = #tpu.core_type<tc>, window_params = [{transform_indices = @transform_0, window_bounds = array<i64: 8, 128>}, {transform_indices = @transform_1, window_bounds = array<i64: 8, 4>}, {transform_indices = @transform_2, window_bounds = array<i64: 1, 1>}]} {
    %c0_i32 = arith.constant 0 : i32
    %0 = arith.cmpi eq, %arg1, %c0_i32 : i32
    %1 = arith.extui %0 : i1 to i32
    %c0_i32_0 = arith.constant 0 : i32
    %2 = arith.cmpi ne, %1, %c0_i32_0 : i32
    scf.if %2 {
      %cst_11 = arith.constant 0.000000e+00 : f32
      %35 = vector.broadcast %cst_11 : f32 to vector<8x128xf32>
      %c0_12 = arith.constant 0 : index
      %c0_13 = arith.constant 0 : index
      %36 = vector.load %arg5[%c0_12, %c0_13] : memref<8x128xf32, #tpu.memory_space<vmem>>, vector<8x128xf32>
      tpu.vector_store %arg5[%c0_12, %c0_13], %35 {strides = array<i32>} : memref<8x128xf32, #tpu.memory_space<vmem>>, vector<8x128xf32>,
    } else {
    }
    %3 = tpu.iota {dimensions = array<i32: 1>} : vector<8x128xi32>
    %c0_i32_1 = arith.constant 0 : i32
    %c1_i32 = arith.constant 1 : i32
    %4 = arith.muli %c0_i32_1, %c1_i32 : i32
    %c0_i32_2 = arith.constant 0 : i32
    %5 = arith.addi %c0_i32_2, %4 : i32
    %c8_i32 = arith.constant 8 : i32
    %6 = arith.muli %5, %c8_i32 : i32
    %7 = tpu.assume_multiple %6, 8 : i32
    %8 = arith.index_cast %7 : i32 to index
    %c0 = arith.constant 0 : index
    %9 = vector.load %arg2[%8, %c0] : memref<8x128xf32, #tpu.memory_space<vmem>>, vector<8x128xf32>
    %10 = arith.index_cast %7 : i32 to index
    %c0_3 = arith.constant 0 : index
    %11 = vector.load %arg3[%10, %c0_3] : memref<8x4xi32, #tpu.memory_space<vmem>>, vector<8x4xi32>
    %12 = vector.extract_strided_slice %11 {offsets = [0, 0], sizes = [8, 1], strides = [1, 1]} : vector<8x4xi32> to vector<8x1xi32>
    %13 = vector.broadcast %12 : vector<8x1xi32> to vector<8x128xi32>
    %14 = arith.cmpi eq, %3, %13 : vector<8x128xi32>
    %15 = vector.extract_strided_slice %11 {offsets = [0, 1], sizes = [8, 1], strides = [1, 1]} : vector<8x4xi32> to vector<8x1xi32>
    %16 = vector.broadcast %15 : vector<8x1xi32> to vector<8x128xi32>
    %17 = arith.cmpi eq, %3, %16 : vector<8x128xi32>
    %18 = arith.ori %14, %17 : vector<8x128xi1>
    %19 = vector.extract_strided_slice %11 {offsets = [0, 2], sizes = [8, 1], strides = [1, 1]} : vector<8x4xi32> to vector<8x1xi32>
    %20 = vector.broadcast %19 : vector<8x1xi32> to vector<8x128xi32>
    %21 = arith.cmpi eq, %3, %20 : vector<8x128xi32>
    %22 = arith.ori %18, %21 : vector<8x128xi1>
    %23 = vector.extract_strided_slice %11 {offsets = [0, 3], sizes = [8, 1], strides = [1, 1]} : vector<8x4xi32> to vector<8x1xi32>
    %24 = vector.broadcast %23 : vector<8x1xi32> to vector<8x128xi32>
    %25 = arith.cmpi eq, %3, %24 : vector<8x128xi32>
    %26 = arith.ori %22, %25 : vector<8x128xi1>
    %c0_4 = arith.constant 0 : index
    %c0_5 = arith.constant 0 : index
    %27 = vector.load %arg5[%c0_4, %c0_5] : memref<8x128xf32, #tpu.memory_space<vmem>>, vector<8x128xf32>
    %cst = arith.constant 0.000000e+00 : f32
    %28 = vector.broadcast %cst : f32 to vector<8x128xf32>
    %29 = arith.select %26, %9, %28 : vector<8x128xi1>, vector<8x128xf32>
    %30 = arith.addf %27, %29 : vector<8x128xf32>
    %c0_6 = arith.constant 0 : index
    %c0_7 = arith.constant 0 : index
    %31 = vector.load %arg5[%c0_6, %c0_7] : memref<8x128xf32, #tpu.memory_space<vmem>>, vector<8x128xf32>
    tpu.vector_store %arg5[%c0_6, %c0_7], %30 {strides = array<i32>} : memref<8x128xf32, #tpu.memory_space<vmem>>, vector<8x128xf32>,
    %c1_i32_8 = arith.constant 1 : i32
    %c0_i32_9 = arith.constant 0 : i32
    %32 = arith.cmpi eq, %arg1, %c0_i32_9 : i32
    %33 = arith.extui %32 : i1 to i32
    %c0_i32_10 = arith.constant 0 : i32
    %34 = arith.cmpi ne, %33, %c0_i32_10 : i32
    scf.if %34 {
      %c0_11 = arith.constant 0 : index
      %c0_12 = arith.constant 0 : index
      %35 = vector.load %arg5[%c0_11, %c0_12] : memref<8x128xf32, #tpu.memory_space<vmem>>, vector<8x128xf32>
      %36 = vector.shape_cast %35 : vector<8x128xf32> to vector<1x8x128xf32>
      %cst_13 = arith.constant dense<0.000000e+00> : vector<1xf32>
      %37 = vector.multi_reduction <add>, %36, %cst_13 [1, 2] : vector<1x8x128xf32> to vector<1xf32>
      %38 = vector.shape_cast %37 : vector<1xf32> to vector<1x1x1xf32>
      %39 = vector.extract %38[0, 0, 0] : f32 from vector<1x1x1xf32>
      %40 = vector.broadcast %39 : f32 to vector<1x1xf32>
      %c0_14 = arith.constant 0 : index
      %c0_15 = arith.constant 0 : index
      %41 = vector.load %arg4[%c0_14, %c0_15] : memref<1x1xf32, #tpu.memory_space<vmem>>, vector<1x1xf32>
      tpu.vector_store %arg4[%c0_14, %c0_15], %40 {strides = array<i32>} : memref<1x1xf32, #tpu.memory_space<vmem>>, vector<1x1xf32>,
    } else {
    }
    return
  }
  func.func @transform_0(%arg0: i32, %arg1: i32) -> (i32, i32) {
    %c1_i32 = arith.constant 1 : i32
    %0 = arith.muli %arg0, %c1_i32 : i32
    %1 = arith.addi %0, %arg1 : i32
    %c0_i32 = arith.constant 0 : i32
    %2 = arith.minsi %1, %c0_i32 : i32
    %c0_i32_0 = arith.constant 0 : i32
    %c0_i32_1 = arith.constant 0 : i32
    return %2, %c0_i32_0 : i32, i32
  }
  func.func @transform_1(%arg0: i32, %arg1: i32) -> (i32, i32) {
    %c1_i32 = arith.constant 1 : i32
    %0 = arith.muli %arg0, %c1_i32 : i32
    %1 = arith.addi %0, %arg1 : i32
    %c0_i32 = arith.constant 0 : i32
    %c0_i32_0 = arith.constant 0 : i32
    return %1, %c0_i32 : i32, i32
  }
  func.func @transform_2(%arg0: i32, %arg1: i32) -> (i32, i32) {
    %c0_i32 = arith.constant 0 : i32
    %c0_i32_0 = arith.constant 0 : i32
    return %arg0, %c0_i32 : i32, i32
  }
}

</mosaic_0001>

<llo_original>
// kernel: tpu_custom_call.1
$region0: #{tpu_custom_call.1}
  #allocation0 [shape = 'u32[]', space=smem, size = 0x4, offset = 0x4, fixed_abs, tag = 'smem constant byte address 0x4 - core index']
  #allocation1 [shape = 'u32[144,128]{1,0:T(1,128)}', space=vmem, size = 0x12000, scoped, tag = 'internal scratch']
  #allocation2 [shape = 'f32[8,128]{1,0:T(8,128)}', space=vmem, size = 0x1000, scoped, tag = 'scratch operand']
  %s0 = inlined_call_operand.vmem [shape: f32[8,128], index: 0, kind: input, shape index: {}]
  %s1 = inlined_call_operand.vmem [shape: s32[8,4], index: 1, kind: input, shape index: {}]
  %s2 = inlined_call_operand.hbm [shape: f32[1,1], index: 2, kind: output, shape index: {}]
  %s3 = sld [smem:[#allocation0]]
  $region26: #{tpu_custom_call.1} parent=0
    _
  %s5 = ssub.s32 1, %s3
  %s6 = scalar_select 0, %s5, %s3
  $region1: #{tpu_custom_call.1} parent=0
    #allocation3 [shape = 'u8[512]{0}', space=vmem, size = 0x400, scoped, tag = 'output window, operand 0, single buffered']
    #allocation4 [shape = 's32[1]{0}', space=sflag, size = 0x4, scoped, tag = 'scoped memory for tpu_custom_call.1']
    %7 = vsyncpa [#allocation4], 0
    // Predicated region
    $region2: #{tpu_custom_call.1} parent=1 // pred_check
      _
    $region3: #{tpu_custom_call.1} parent=1 // pred_check_branch
      %9 = sbr.rel (0) target = $region5
    $region4: #{tpu_custom_call.1} parent=1 // pred_region
      %s10 = sadd.s32 0, 0
      %p11 = scmp.lt.s32.totalorder %s10, 0
      %s12 = scalar_select %p11, %s10, 0
      %p13 = scmp.lt.s32.totalorder %s12, 0
      %s14 = scalar_select %p13, %s12, 0
      %s15 = smul.addr %s14, 8
      %s16 = scalar_lea.vmem %s0, %s15
      %s17 = sadd.s32 0, 0
      %p18 = scmp.lt.s32.totalorder %s17, 0
      %s19 = scalar_select %p18, %s17, 0
    $region5: #{tpu_custom_call.1} parent=1 // pred_fallthru
      _
    // Predicated region
    $region6: #{tpu_custom_call.1} parent=1 // pred_check
      _
    $region7: #{tpu_custom_call.1} parent=1 // pred_check_branch
      %21 = sbr.rel (0) target = $region9
    $region8: #{tpu_custom_call.1} parent=1 // pred_region
      %s22 = sadd.s32 0, 0
      %p23 = scmp.lt.s32.totalorder %s22, 0
      %s24 = scalar_select %p23, %s22, 0
      %s25 = smul.addr %s24, 8
      %s26 = scalar_lea.vmem %s1, %s25
      %s27 = sadd.s32 0, 0
    $region9: #{tpu_custom_call.1} parent=1 // pred_fallthru
      _
    %s28 = sadd.s32 0, 0
    %p29 = scmp.lt.s32.totalorder %s28, 0
    %s30 = scalar_select %p29, %s28, 0
    %p31 = scmp.lt.s32.totalorder %s30, 0
    %s32 = scalar_select %p31, %s30, 0
    %s33 = smul.addr %s32, 8
    %s34 = scalar_lea.vmem %s0, %s33
    %s35 = sadd.s32 0, 0
    %p36 = scmp.lt.s32.totalorder %s35, 0
    %s37 = scalar_select %p36, %s35, 0
    %s38 = smul.addr %s37, 8
    %s39 = scalar_lea.vmem %s1, %s38
    %s40 = sadd.s32 0, 0
    %p41 = scmp.lt.s32.totalorder %s40, 0
    %s42 = scalar_select %p41, %s40, 0
    %p43 = scmp.lt.s32.totalorder %s42, 0
    %s44 = scalar_select %p43, %s42, 0
    %s45 = smul.addr %s44, 8
    %s46 = scalar_lea.vmem %s0, %s45
    %s47 = sadd.s32 0, 0
    %p48 = scmp.lt.s32.totalorder %s47, 0
    %s49 = scalar_select %p48, %s47, 0
    %s50 = sadd.s32 0, 0
    %p51 = scmp.lt.s32.totalorder %s50, 0
    %s52 = scalar_select %p51, %s50, 0
    %s53 = smul.addr %s52, 8
    %s54 = scalar_lea.vmem %s1, %s53
    %s55 = sadd.s32 0, 0
    %p56 = scmp.eq.s32.totalorder 0, 0
    // Predicated region
    $region10: #{tpu_custom_call.1} parent=1 // pred_check
      %p57 = pneg %p56
    $region11: #{tpu_custom_call.1} parent=1 // pred_check_branch
      %59 = sbr.rel (%p57) target = $region13
    $region12: #{tpu_custom_call.1} parent=1 // pred_region
      %60 = vst [vmem:[#allocation2] sm:$0xff] 0.0
    $region13: #{tpu_custom_call.1} parent=1 // pred_fallthru
      _
    %v61 = vlaneseq
    %v62 = vand.u32 %v61, 127
    %v63 = vld [vmem:[%s46] sm:$0xff]
    %v64 = vld [vmem:[%s54] sm:$0xff]
    %65 = vset.pattern.permute.xlu0 0
    %66 = vperm.xlu0 %65, %v64
    %v67 = vpop.permute.xlu0 %66
    %vm68 = vcmp.eq.s32.totalorder %v62, %v67
    %69 = vset.pattern.permute.xlu0 1
    %70 = vperm.xlu0 %69, %v64
    %v71 = vpop.permute.xlu0 %70
    %vm72 = vcmp.eq.s32.totalorder %v62, %v71
    %vm73 = vmor %vm68, %vm72
    %74 = vset.pattern.permute.xlu0 2
    %75 = vperm.xlu0 %74, %v64
    %v76 = vpop.permute.xlu0 %75
    %vm77 = vcmp.eq.s32.totalorder %v62, %v76
    %vm78 = vmor %vm73, %vm77
    %79 = vset.pattern.permute.xlu0 3
    %80 = vperm.xlu0 %79, %v64
    %v81 = vpop.permute.xlu0 %80
    %vm82 = vcmp.eq.s32.totalorder %v62, %v81
    %vm83 = vmor %vm78, %vm82
    %v84 = vld [vmem:[#allocation2] sm:$0xff]
    %v85 = vsel %vm83, %v63, 0.0
    %v86 = vadd.f32 %v84, %v85
    %87 = vst [vmem:[#allocation2] sm:$0xff] %v86
    // Predicated region
    $region14: #{tpu_custom_call.1} parent=1 // pred_check
      %p88 = pneg %p56
    $region15: #{tpu_custom_call.1} parent=1 // pred_check_branch
      %90 = sbr.rel (%p88) target = $region17
    $region16: #{tpu_custom_call.1} parent=1 // pred_region
      %v91 = vld [vmem:[#allocation2] sm:$0xff]
      %92 = vadd.xlane.f32.xlu0 %v91
      %v93 = vpop.xlane.xlu0 %92
      %v94 = vrot.slane %v93, 4
      %v95 = vadd.f32 %v93, %v94
      %v96 = vrot.slane %v95, 2
      %v97 = vadd.f32 %v95, %v96
      %v98 = vrot.slane %v97, 1
      %v99 = vadd.f32 %v97, %v98
      %s100 = vtos %v99
      %v101 = vstv %s100
      %vm102 = vcmask 0
      %103 = vst.msk [vmem:[#allocation3] sm:$0x1] %vm102, %v101
    $region17: #{tpu_custom_call.1} parent=1 // pred_fallthru
      _
    // Predicated region
    $region18: #{tpu_custom_call.1} parent=1 // pred_check
      _
    $region19: #{tpu_custom_call.1} parent=1 // pred_check_branch
      %105 = sbr.rel (0) target = $region21
    $region20: #{tpu_custom_call.1} parent=1 // pred_region
      %s107 = ssub.s32 16, 16
      %108 = vsyncadd [#allocation4], %s107
      %s110 = sshll.u32 [#allocation3], 4
      %s111 = int_to_ptr.vmem [resolvable:$true] %s110
      %113 = dma.vmem_to_hbm [thread:$0]  %s111, 16, %s2, [#allocation4]
    $region21: #{tpu_custom_call.1} parent=1 // pred_fallthru
      _
    // Predicated region
    $region22: #{tpu_custom_call.1} parent=1 // pred_check
      _
    $region23: #{tpu_custom_call.1} parent=1 // pred_check_branch
      %115 = sbr.rel (0) target = $region25
    $region24: #{tpu_custom_call.1} parent=1 // pred_region
      %116 = dma.done [#allocation4], 16
    $region25: #{tpu_custom_call.1} parent=1 // pred_fallthru
      _
    %117 = vsyncpa [#allocation4], 1

</llo_original>
